<compile_context>
chip_gen: v6e
topology: v6e:2x2x1
jax: 0.10.0
libtpu: 0.0.40
codegen_flags: <defaults>
</compile_context>

<pallas_src>
import functools
import numpy as np
import jax
import jax.numpy as jnp
from jax.experimental import pallas as pl
from jax.experimental.pallas import tpu as pltpu


# ----------------------------------------------------------------------------------------
# Quantum statevector simulation (plain JAX "glue" that produces Q, K, V features)
# ----------------------------------------------------------------------------------------
_PAULI_X = jnp.array([[0, 1], [1, 0]], dtype=jnp.complex64)
_PAULI_Y = jnp.array([[0, -1j], [1j, 0]], dtype=jnp.complex64)
_PAULI_Z = jnp.array([[1, 0], [0, -1]], dtype=jnp.complex64)
_PAULIS = (_PAULI_Z, _PAULI_X, _PAULI_Y)   # pauli_idx 0 -> Z, 1 -> X, 2 -> Y


def _rx(theta):
    c = jnp.cos(theta / 2).astype(jnp.complex64)
    ms = (-1j) * jnp.sin(theta / 2).astype(jnp.complex64)
    return jnp.stack([jnp.stack([c, ms]), jnp.stack([ms, c])])


def _ry(theta):
    c = jnp.cos(theta / 2)
    s = jnp.sin(theta / 2)
    return jnp.stack([jnp.stack([c, -s]), jnp.stack([s, c])]).astype(jnp.complex64)


def _apply_1q(state, gate, wire):
    state = jnp.tensordot(gate, state, axes=[[1], [wire]])
    return jnp.moveaxis(state, 0, wire)


def _cnot(state, control, target):
    s0, s1 = jnp.split(state, 2, axis=control)
    s1 = jnp.flip(s1, axis=target)
    return jnp.concatenate([s0, s1], axis=control)


def _run_circuit(x, w, n, Denc, D):
    """Shared ansatz of circuit_qk / circuit_v: returns final statevector (2,)*n."""
    state = jnp.zeros((2,) * n, dtype=jnp.complex64).at[(0,) * n].set(1.0)
    # data encoding
    idx = 0
    for j in range(n):
        state = _apply_1q(state, _rx(x[idx]), j)
        state = _apply_1q(state, _ry(x[idx + 1]), j)
        idx += 2
    for _ in range(Denc):
        for j in range(n):
            state = _cnot(state, j, (j + 1) % n)
        for j in range(n):
            state = _apply_1q(state, _ry(x[idx]), j)
            idx += 1
    # trainable ansatz
    idx = 0
    for j in range(n):
        state = _apply_1q(state, _rx(w[idx]), j)
        state = _apply_1q(state, _ry(w[idx + 1]), j)
        idx += 2
    for _ in range(D):
        for j in range(n):
            state = _cnot(state, j, (j + 1) % n)
        for j in range(n):
            state = _apply_1q(state, _ry(w[idx]), j)
            idx += 1
    return state


def _expval(state, pauli, wire):
    ps = _apply_1q(state, pauli, wire)
    return jnp.real(jnp.sum(jnp.conj(state) * ps))


def _circuit_qk(x, w, n, Denc, D):
    state = _run_circuit(x, w, n, Denc, D)
    return _expval(state, _PAULI_Z, 0)          # scalar <Z_0>


def _circuit_v(x, w, n, Denc, D, d):
    state = _run_circuit(x, w, n, Denc, D)
    vals = []
    for i in range(d):
        qubit = i % n
        pauli_idx = (i // n) % 3
        vals.append(_expval(state, _PAULIS[pauli_idx], qubit))
    return jnp.stack(vals)                      # (d,)


# ----------------------------------------------------------------------------------------
# Pallas kernel: Gaussian-kernel self attention + residual (classical hot path)
# Batch-tiled grid ("parallel"), VPU contraction (no MXU micro-matmuls), no V tiling.
# ----------------------------------------------------------------------------------------
def _qsal_attn_kernel(qk_ref, v_ref, x_ref, o_ref, *, S, d):
    qk = qk_ref[...]                                   # (tb, 2, S)
    q = qk[:, 0, :]                                    # (tb, S)
    k = qk[:, 1, :]                                    # (tb, S)

    diff = q[:, :, None] - k[:, None, :]               # (tb, S, S)
    alpha = jnp.exp(-(diff * diff))                    # unnormalized Gaussian weights
    sum_a = jnp.sum(alpha, axis=2)                     # (tb, S), >= 1 (diag term = 1)

    # EUP approximate reciprocal + one Newton step (~f32 accuracy, no VALU divide).
    r = pl.reciprocal(sum_a, approx=True)
    r = r * (2.0 - sum_a * r)                          # Newton refinement

    v = v_ref[...]                                     # (tb, S, d)

    # S(=8)-deep contraction kept on the VPU: unrolled multiply-add over key positions.
    wv = alpha[:, :, 0:1] * v[:, 0:1, :]               # (tb, S, d)
    for t in range(1, S):
        wv = wv + alpha[:, :, t:t + 1] * v[:, t:t + 1, :]
    wv = wv * r[:, :, None]                            # deferred normalization

    o_ref[...] = (x_ref[...] + wv).astype(o_ref.dtype)


def qsal_attention(q, k, v, x, *, batch_tile=512):
    """q, k: (B, S);  v: (B, S, d);  x: (B, S, d)  ->  (B, S, d)."""
    B, S, d = x.shape
    qk = jnp.stack([q, k], axis=1).astype(jnp.float32)      # (B, 2, S): one DMA stream
    v = v.astype(jnp.float32)

    tb = min(B, batch_tile)
    grid = (pl.cdiv(B, tb),)

    kernel = functools.partial(_qsal_attn_kernel, S=S, d=d)
    out = pl.pallas_call(
        kernel,
        out_shape=jax.ShapeDtypeStruct((B, S, d), x.dtype),
        grid=grid,
        in_specs=[
            pl.BlockSpec((tb, 2, S), lambda i: (i, 0, 0)),
            pl.BlockSpec((tb, S, d), lambda i: (i, 0, 0)),
            pl.BlockSpec((tb, S, d), lambda i: (i, 0, 0)),
        ],
        out_specs=pl.BlockSpec((tb, S, d), lambda i: (i, 0, 0)),
        input_output_aliases={2: 0},                          # out written over the x slab
        compiler_params=pltpu.CompilerParams(
            dimension_semantics=("parallel",)),               # megacore-shard the batch axis
    )(qk, v, x)
    return out


# ----------------------------------------------------------------------------------------
# Full QSAL forward
# ----------------------------------------------------------------------------------------
def qsal_forward(x, w_q, w_k, w_v, *, S, n, Denc, D):
    d = n * (Denc + 2)
    qk_fn = functools.partial(_circuit_qk, n=n, Denc=Denc, D=D)
    v_fn = functools.partial(_circuit_v, n=n, Denc=Denc, D=D, d=d)

    # The torch transpose(0,1).reshape(S*B,d) -> per-row circuit -> reshape back is a
    # purely row-wise mapping; vmapping directly over (B, S) gives the same result with
    # no transpose/reshape HBM round-trips.
    q = jax.vmap(jax.vmap(lambda r: qk_fn(r, w_q)))(x)          # (B, S)
    k = jax.vmap(jax.vmap(lambda r: qk_fn(r, w_k)))(x)          # (B, S)
    v = jax.vmap(jax.vmap(lambda r: v_fn(r, w_v)))(x)           # (B, S, d)

    return qsal_attention(q.astype(x.dtype), k.astype(x.dtype), v.astype(x.dtype), x)


def _attention_reference(Q, K, V, x):
    # pure-JAX mirror of the PyTorch tensor algebra, for a correctness check
    Qe = Q[:, :, None, :]                 # (B,S,1,1)
    Ke = K[:, None, :, :]                 # (B,1,S,1)
    alpha = jnp.exp(-(Qe - Ke) ** 2)      # (B,S,S,1)
    sum_a = jnp.sum(alpha, axis=2, keepdims=True)
    alpha_n = alpha / sum_a
    weighted = alpha_n * V[:, None, :, :]
    return x + jnp.sum(weighted, axis=2)


# ----------------------------------------------------------------------------------------
if __name__ == "__main__":
    # QSAL_pennylane(S=8, n=4, Denc=2, D=1):  d = n*(Denc+2) = 16
    S, n, Denc, D = 8, 4, 2, 1
    d = n * (Denc + 2)
    B = 2

    key = jax.random.PRNGKey(0)
    k1, k2, k3, k4 = jax.random.split(key, 4)
    # init_params_* = pi/4 * (2*randn(n*(D+2)) - 1)
    w_q = (np.pi / 4) * (2.0 * jax.random.normal(k1, (n * (D + 2),), jnp.float32) - 1.0)
    w_k = (np.pi / 4) * (2.0 * jax.random.normal(k2, (n * (D + 2),), jnp.float32) - 1.0)
    w_v = (np.pi / 4) * (2.0 * jax.random.normal(k3, (n * (D + 2),), jnp.float32) - 1.0)

    x = jax.random.normal(k4, (B, S, d), jnp.float32)

    fwd = jax.jit(functools.partial(qsal_forward, S=S, n=n, Denc=Denc, D=D))
    out = jax.block_until_ready(fwd(x, w_q, w_k, w_v))
    assert out.shape == (B, S, d) and out.dtype == jnp.float32

    # cross-check the Pallas attention against a pure-JAX reference
    qk_fn = functools.partial(_circuit_qk, n=n, Denc=Denc, D=D)
    v_fn = functools.partial(_circuit_v, n=n, Denc=Denc, D=D, d=d)
    Q = jax.vmap(jax.vmap(lambda r: qk_fn(r, w_q)))(x)[..., None]   # (B, S, 1)
    K = jax.vmap(jax.vmap(lambda r: qk_fn(r, w_k)))(x)[..., None]   # (B, S, 1)
    V = jax.vmap(jax.vmap(lambda r: v_fn(r, w_v)))(x)               # (B, S, d)
    ref = _attention_reference(Q, K, V, x)
    np.testing.assert_allclose(np.asarray(out), np.asarray(ref), rtol=1e-5, atol=1e-5)

    print("KERNEL_OK")
</pallas_src>

<mosaic_0001>
module attributes {stable_mosaic.version = 11 : i64} {
  func.func @_qsal_attn_kernel(%arg0: i32, %arg1: memref<2x2x8xf32, #tpu.memory_space<vmem>>, %arg2: memref<2x8x16xf32, #tpu.memory_space<vmem>>, %arg3: memref<2x8x16xf32, #tpu.memory_space<vmem>>, %arg4: memref<2x8x16xf32, #tpu.memory_space<vmem>>) attributes {dimension_semantics = [#tpu.dimension_semantics<parallel>], iteration_bounds = array<i64: 1>, scalar_prefetch = 0 : i64, scratch_operands = 0 : i64, tpu.core_type = #tpu.core_type<tc>, window_params = [{transform_indices = @transform_0, window_bounds = array<i64: 2, 2, 8>}, {transform_indices = @transform_1, window_bounds = array<i64: 2, 8, 16>}, {transform_indices = @transform_2, window_bounds = array<i64: 2, 8, 16>}, {transform_indices = @transform_3, window_bounds = array<i64: 2, 8, 16>}]} {
    %c0 = arith.constant 0 : index
    %c0_0 = arith.constant 0 : index
    %c0_1 = arith.constant 0 : index
    %0 = vector.load %arg1[%c0, %c0_0, %c0_1] : memref<2x2x8xf32, #tpu.memory_space<vmem>>, vector<2x2x8xf32>
    %1 = vector.extract_strided_slice %0 {offsets = [0, 0, 0], sizes = [2, 1, 8], strides = [1, 1, 1]} : vector<2x2x8xf32> to vector<2x1x8xf32>
    %2 = vector.shape_cast %1 : vector<2x1x8xf32> to vector<2x8xf32>
    %3 = vector.extract_strided_slice %0 {offsets = [0, 1, 0], sizes = [2, 1, 8], strides = [1, 1, 1]} : vector<2x2x8xf32> to vector<2x1x8xf32>
    %4 = vector.shape_cast %3 : vector<2x1x8xf32> to vector<2x8xf32>
    %5 = vector.shape_cast %2 : vector<2x8xf32> to vector<2x8x1xf32>
    %6 = vector.shape_cast %4 : vector<2x8xf32> to vector<2x1x8xf32>
    %7 = vector.broadcast %5 : vector<2x8x1xf32> to vector<2x8x8xf32>
    %8 = vector.broadcast %6 : vector<2x1x8xf32> to vector<2x8x8xf32>
    %9 = arith.subf %7, %8 : vector<2x8x8xf32>
    %10 = arith.mulf %9, %9 : vector<2x8x8xf32>
    %cst = arith.constant 0.000000e+00 : f32
    %11 = vector.broadcast %cst : f32 to vector<2x8x8xf32>
    %12 = arith.subf %11, %10 : vector<2x8x8xf32>
    %13 = math.exp %12 : vector<2x8x8xf32>
    %cst_2 = arith.constant dense<0.000000e+00> : vector<2x8xf32>
    %14 = vector.multi_reduction <add>, %13, %cst_2 [2] : vector<2x8x8xf32> to vector<2x8xf32>
    %15 = tpu.reciprocal %14 {approx = true} : vector<2x8xf32> -> vector<2x8xf32>
    %16 = arith.mulf %14, %15 : vector<2x8xf32>
    %cst_3 = arith.constant 2.000000e+00 : f32
    %17 = vector.broadcast %cst_3 : f32 to vector<2x8xf32>
    %18 = arith.subf %17, %16 : vector<2x8xf32>
    %19 = arith.mulf %15, %18 : vector<2x8xf32>
    %c0_4 = arith.constant 0 : index
    %c0_5 = arith.constant 0 : index
    %c0_6 = arith.constant 0 : index
    %20 = vector.load %arg2[%c0_4, %c0_5, %c0_6] : memref<2x8x16xf32, #tpu.memory_space<vmem>>, vector<2x8x16xf32>
    %21 = vector.extract_strided_slice %13 {offsets = [0, 0, 0], sizes = [2, 8, 1], strides = [1, 1, 1]} : vector<2x8x8xf32> to vector<2x8x1xf32>
    %22 = vector.extract_strided_slice %20 {offsets = [0, 0, 0], sizes = [2, 1, 16], strides = [1, 1, 1]} : vector<2x8x16xf32> to vector<2x1x16xf32>
    %23 = vector.broadcast %21 : vector<2x8x1xf32> to vector<2x8x16xf32>
    %24 = vector.broadcast %22 : vector<2x1x16xf32> to vector<2x8x16xf32>
    %25 = arith.mulf %23, %24 : vector<2x8x16xf32>
    %26 = vector.extract_strided_slice %13 {offsets = [0, 0, 1], sizes = [2, 8, 1], strides = [1, 1, 1]} : vector<2x8x8xf32> to vector<2x8x1xf32>
    %27 = vector.extract_strided_slice %20 {offsets = [0, 1, 0], sizes = [2, 1, 16], strides = [1, 1, 1]} : vector<2x8x16xf32> to vector<2x1x16xf32>
    %28 = vector.broadcast %26 : vector<2x8x1xf32> to vector<2x8x16xf32>
    %29 = vector.broadcast %27 : vector<2x1x16xf32> to vector<2x8x16xf32>
    %30 = arith.mulf %28, %29 : vector<2x8x16xf32>
    %31 = arith.addf %25, %30 : vector<2x8x16xf32>
    %32 = vector.extract_strided_slice %13 {offsets = [0, 0, 2], sizes = [2, 8, 1], strides = [1, 1, 1]} : vector<2x8x8xf32> to vector<2x8x1xf32>
    %33 = vector.extract_strided_slice %20 {offsets = [0, 2, 0], sizes = [2, 1, 16], strides = [1, 1, 1]} : vector<2x8x16xf32> to vector<2x1x16xf32>
    %34 = vector.broadcast %32 : vector<2x8x1xf32> to vector<2x8x16xf32>
    %35 = vector.broadcast %33 : vector<2x1x16xf32> to vector<2x8x16xf32>
    %36 = arith.mulf %34, %35 : vector<2x8x16xf32>
    %37 = arith.addf %31, %36 : vector<2x8x16xf32>
    %38 = vector.extract_strided_slice %13 {offsets = [0, 0, 3], sizes = [2, 8, 1], strides = [1, 1, 1]} : vector<2x8x8xf32> to vector<2x8x1xf32>
    %39 = vector.extract_strided_slice %20 {offsets = [0, 3, 0], sizes = [2, 1, 16], strides = [1, 1, 1]} : vector<2x8x16xf32> to vector<2x1x16xf32>
    %40 = vector.broadcast %38 : vector<2x8x1xf32> to vector<2x8x16xf32>
    %41 = vector.broadcast %39 : vector<2x1x16xf32> to vector<2x8x16xf32>
    %42 = arith.mulf %40, %41 : vector<2x8x16xf32>
    %43 = arith.addf %37, %42 : vector<2x8x16xf32>
    %44 = vector.extract_strided_slice %13 {offsets = [0, 0, 4], sizes = [2, 8, 1], strides = [1, 1, 1]} : vector<2x8x8xf32> to vector<2x8x1xf32>
    %45 = vector.extract_strided_slice %20 {offsets = [0, 4, 0], sizes = [2, 1, 16], strides = [1, 1, 1]} : vector<2x8x16xf32> to vector<2x1x16xf32>
    %46 = vector.broadcast %44 : vector<2x8x1xf32> to vector<2x8x16xf32>
    %47 = vector.broadcast %45 : vector<2x1x16xf32> to vector<2x8x16xf32>
    %48 = arith.mulf %46, %47 : vector<2x8x16xf32>
    %49 = arith.addf %43, %48 : vector<2x8x16xf32>
    %50 = vector.extract_strided_slice %13 {offsets = [0, 0, 5], sizes = [2, 8, 1], strides = [1, 1, 1]} : vector<2x8x8xf32> to vector<2x8x1xf32>
    %51 = vector.extract_strided_slice %20 {offsets = [0, 5, 0], sizes = [2, 1, 16], strides = [1, 1, 1]} : vector<2x8x16xf32> to vector<2x1x16xf32>
    %52 = vector.broadcast %50 : vector<2x8x1xf32> to vector<2x8x16xf32>
    %53 = vector.broadcast %51 : vector<2x1x16xf32> to vector<2x8x16xf32>
    %54 = arith.mulf %52, %53 : vector<2x8x16xf32>
    %55 = arith.addf %49, %54 : vector<2x8x16xf32>
    %56 = vector.extract_strided_slice %13 {offsets = [0, 0, 6], sizes = [2, 8, 1], strides = [1, 1, 1]} : vector<2x8x8xf32> to vector<2x8x1xf32>
    %57 = vector.extract_strided_slice %20 {offsets = [0, 6, 0], sizes = [2, 1, 16], strides = [1, 1, 1]} : vector<2x8x16xf32> to vector<2x1x16xf32>
    %58 = vector.broadcast %56 : vector<2x8x1xf32> to vector<2x8x16xf32>
    %59 = vector.broadcast %57 : vector<2x1x16xf32> to vector<2x8x16xf32>
    %60 = arith.mulf %58, %59 : vector<2x8x16xf32>
    %61 = arith.addf %55, %60 : vector<2x8x16xf32>
    %62 = vector.extract_strided_slice %13 {offsets = [0, 0, 7], sizes = [2, 8, 1], strides = [1, 1, 1]} : vector<2x8x8xf32> to vector<2x8x1xf32>
    %63 = vector.extract_strided_slice %20 {offsets = [0, 7, 0], sizes = [2, 1, 16], strides = [1, 1, 1]} : vector<2x8x16xf32> to vector<2x1x16xf32>
    %64 = vector.broadcast %62 : vector<2x8x1xf32> to vector<2x8x16xf32>
    %65 = vector.broadcast %63 : vector<2x1x16xf32> to vector<2x8x16xf32>
    %66 = arith.mulf %64, %65 : vector<2x8x16xf32>
    %67 = arith.addf %61, %66 : vector<2x8x16xf32>
    %68 = vector.shape_cast %19 : vector<2x8xf32> to vector<2x8x1xf32>
    %69 = vector.broadcast %68 : vector<2x8x1xf32> to vector<2x8x16xf32>
    %70 = arith.mulf %67, %69 : vector<2x8x16xf32>
    %c0_7 = arith.constant 0 : index
    %c0_8 = arith.constant 0 : index
    %c0_9 = arith.constant 0 : index
    %71 = vector.load %arg3[%c0_7, %c0_8, %c0_9] : memref<2x8x16xf32, #tpu.memory_space<vmem>>, vector<2x8x16xf32>
    %72 = arith.addf %71, %70 : vector<2x8x16xf32>
    %c0_10 = arith.constant 0 : index
    %c0_11 = arith.constant 0 : index
    %c0_12 = arith.constant 0 : index
    %73 = vector.load %arg4[%c0_10, %c0_11, %c0_12] : memref<2x8x16xf32, #tpu.memory_space<vmem>>, vector<2x8x16xf32>
    tpu.vector_store %arg4[%c0_10, %c0_11, %c0_12], %72 {strides = array<i32>} : memref<2x8x16xf32, #tpu.memory_space<vmem>>, vector<2x8x16xf32>,
    return
  }
  func.func @transform_0(%arg0: i32) -> (i32, i32, i32) {
    %c0_i32 = arith.constant 0 : i32
    %c0_i32_0 = arith.constant 0 : i32
    %c0_i32_1 = arith.constant 0 : i32
    return %arg0, %c0_i32, %c0_i32_0 : i32, i32, i32
  }
  func.func @transform_1(%arg0: i32) -> (i32, i32, i32) {
    %c0_i32 = arith.constant 0 : i32
    %c0_i32_0 = arith.constant 0 : i32
    %c0_i32_1 = arith.constant 0 : i32
    return %arg0, %c0_i32, %c0_i32_0 : i32, i32, i32
  }
  func.func @transform_2(%arg0: i32) -> (i32, i32, i32) {
    %c0_i32 = arith.constant 0 : i32
    %c0_i32_0 = arith.constant 0 : i32
    %c0_i32_1 = arith.constant 0 : i32
    return %arg0, %c0_i32, %c0_i32_0 : i32, i32, i32
  }
  func.func @transform_3(%arg0: i32) -> (i32, i32, i32) {
    %c0_i32 = arith.constant 0 : i32
    %c0_i32_0 = arith.constant 0 : i32
    %c0_i32_1 = arith.constant 0 : i32
    return %arg0, %c0_i32, %c0_i32_0 : i32, i32, i32
  }
}

</mosaic_0001>

<llo_original>
// kernel: qsal_forward.1
$region0: #{qsal_forward.1}
  #allocation0 [shape = 'u32[]', space=smem, size = 0x4, offset = 0x4, fixed_abs, tag = 'smem constant byte address 0x4 - core index']
  #allocation1 [shape = 'u32[144,128]{1,0:T(1,128)}', space=vmem, size = 0x12000, scoped, tag = 'internal scratch']
  %s0 = inlined_call_operand.vmem [shape: f32[2,2,8], index: 0, kind: input, shape index: {}]
  %s1 = inlined_call_operand.vmem [shape: f32[2,8,16], index: 1, kind: input, shape index: {}]
  %s2 = inlined_call_operand.hbm [shape: f32[2,8,16], index: 2, kind: input, shape index: {}, may-alias: {2,3}]
  %s3 = inlined_call_operand.hbm [shape: f32[2,8,16], index: 3, kind: output, shape index: {}, may-alias: {2,3}]
  %s4 = sld [smem:[#allocation0]]
  $region26: #{qsal_forward.1} parent=0
    _
  %s6 = ssub.s32 1, %s4
  %s7 = scalar_select 0, %s6, %s4
  $region1: #{qsal_forward.1} parent=0
    #allocation2 [shape = 'u8[8192]{0}', space=vmem, size = 0x2000, scoped, tag = 'input window, operand 2, single buffered']
    #allocation3 [shape = 's32[1]{0}', space=sflag, size = 0x4, scoped, tag = 'scoped memory for qsal_forward.1']
    #allocation4 [shape = 's32[1]{0}', space=sflag, size = 0x4, scoped, tag = 'scoped memory for qsal_forward.1']
    #allocation5 [shape = 'u8[8192]{0}', space=vmem, size = 0x2000, scoped, tag = 'output window, operand 0, single buffered']
    %8 = vsyncpa [#allocation3], 0
    %9 = vsyncpa [#allocation4], 0
    // Predicated region
    $region2: #{qsal_forward.1} parent=1 // pred_check
      _
    $region3: #{qsal_forward.1} parent=1 // pred_check_branch
      %11 = sbr.rel (0) target = $region5
    $region4: #{qsal_forward.1} parent=1 // pred_region
      _
    $region5: #{qsal_forward.1} parent=1 // pred_fallthru
      _
    // Predicated region
    $region6: #{qsal_forward.1} parent=1 // pred_check
      _
    $region7: #{qsal_forward.1} parent=1 // pred_check_branch
      %13 = sbr.rel (0) target = $region9
    $region8: #{qsal_forward.1} parent=1 // pred_region
      _
    $region9: #{qsal_forward.1} parent=1 // pred_fallthru
      _
    // Predicated region
    $region10: #{qsal_forward.1} parent=1 // pred_check
      _
    $region11: #{qsal_forward.1} parent=1 // pred_check_branch
      %15 = sbr.rel (0) target = $region13
    $region12: #{qsal_forward.1} parent=1 // pred_region
      %s17 = ssub.s32 256, 256
      %18 = vsyncadd [#allocation3], %s17
      %s19 = sshll.u32 [#allocation2], 4
      %s20 = int_to_ptr.vmem [resolvable:$true] %s19
      %25 = dma.hbm_to_vmem [thread:$0]  %s2, 256, %s20, [#allocation3], 128, 128, 8
    $region13: #{qsal_forward.1} parent=1 // pred_fallthru
      _
    // Predicated region
    $region14: #{qsal_forward.1} parent=1 // pred_check
      _
    $region15: #{qsal_forward.1} parent=1 // pred_check_branch
      %27 = sbr.rel (0) target = $region17
    $region16: #{qsal_forward.1} parent=1 // pred_region
      %28 = dma.done [#allocation3], 256
    $region17: #{qsal_forward.1} parent=1 // pred_fallthru
      _
    %v29 = vld [vmem:[%s0] sm:$0x3]
    %v30 = vld [vmem:[%s0 + $0x2] sm:$0x3]
    %v31 = vlaneseq
    %v32 = vshrl.u32 %v31, 7
    %v33 = vsub.s32 0, %v32
    %v34 = vrot.slane %v29, %v33
    %36 = vbcast.lane.b32.xlu0 %v34, 256
    %v37 = vpop.permute.xlu0 %36
    %v38 = vlaneseq
    %v39 = vshrl.u32 %v38, 7
    %v40 = vsub.s32 0, %v39
    %v41 = vrot.slane %v30, %v40
    %43 = vbcast.lane.b32.xlu0 %v41, 256
    %v44 = vpop.permute.xlu0 %43
    %v45 = vlaneseq
    %v46 = vshrl.u32 %v45, 7
    %v47 = vsub.s32 1, %v46
    %v48 = vrot.slane %v29, %v47
    %v49 = vlaneseq
    %v50 = vshrl.u32 %v49, 7
    %v51 = vsub.s32 1, %v50
    %v52 = vrot.slane %v30, %v51
    %v53 = vsub.f32 %v37, %v48
    %v54 = vsub.f32 %v44, %v52
    %v55 = vmul.f32 %v53, %v53
    %v56 = vmul.f32 %v54, %v54
    %v57 = vsub.f32 0.0, %v55
    %v58 = vsub.f32 0.0, %v56
    %v59 = vmul.f32 %v57, 1.442695
    %v60 = vpow.pop %v59
    %v61 = vmul.f32 %v58, 1.442695
    %v62 = vpow.pop %v61
    %vm63 = vcmask 64512
    %v64 = vsel %vm63, %v60, 0.0
    %65 = vadd.xlane.f32.xlu0 %v64
    %v66 = vpop.xlane.xlu0 %65
    %v67 = vsel %vm63, %v62, 0.0
    %68 = vadd.xlane.f32.xlu0 %v67
    %v69 = vpop.xlane.xlu0 %68
    %v70 = vrcp.pop %v66
    %v71 = vrcp.pop %v69
    %v72 = vmul.f32 %v66, %v70
    %v73 = vmul.f32 %v69, %v71
    %v74 = vsub.f32 2.0, %v72
    %v75 = vsub.f32 2.0, %v73
    %v76 = vmul.f32 %v70, %v74
    %v77 = vmul.f32 %v71, %v75
    %v78 = vld [vmem:[%s1] sm:$0xff]
    %v79 = vld [vmem:[%s1 + $0x8] sm:$0xff]
    %81 = vset.pattern.permute.xlu0 0
    %82 = vperm.xlu0 %81, %v60
    %v83 = vpop.permute.xlu0 %82
    %86 = vset.pattern.permute.xlu0 0
    %87 = vperm.xlu0 %86, %v62
    %v88 = vpop.permute.xlu0 %87
    %v90 = vlaneseq
    %v91 = vshrl.u32 %v90, 7
    %v92 = vsub.s32 0, %v91
    %v93 = vrot.slane %v78, %v92
    %v94 = vlaneseq
    %v95 = vshrl.u32 %v94, 7
    %v96 = vsub.s32 0, %v95
    %v97 = vrot.slane %v79, %v96
    %v98 = vmul.f32 %v83, %v93
    %v99 = vmul.f32 %v88, %v97
    %100 = vset.pattern.permute.xlu0 1
    %101 = vperm.xlu0 %100, %v60
    %v102 = vpop.permute.xlu0 %101
    %104 = vset.pattern.permute.xlu0 1
    %105 = vperm.xlu0 %104, %v62
    %v106 = vpop.permute.xlu0 %105
    %v108 = vlaneseq
    %v109 = vshrl.u32 %v108, 7
    %v110 = vsub.s32 1, %v109
    %v111 = vrot.slane %v78, %v110
    %v112 = vlaneseq
    %v113 = vshrl.u32 %v112, 7
    %v114 = vsub.s32 1, %v113
    %v115 = vrot.slane %v79, %v114
    %v116 = vmul.f32 %v102, %v111
    %v117 = vmul.f32 %v106, %v115
    %v118 = vadd.f32 %v98, %v116
    %v119 = vadd.f32 %v99, %v117
    %120 = vset.pattern.permute.xlu0 2
    %121 = vperm.xlu0 %120, %v60
    %v122 = vpop.permute.xlu0 %121
    %124 = vset.pattern.permute.xlu0 2
    %125 = vperm.xlu0 %124, %v62
    %v126 = vpop.permute.xlu0 %125
    %v128 = vlaneseq
    %v129 = vshrl.u32 %v128, 7
    %v130 = vsub.s32 2, %v129
    %v131 = vrot.slane %v78, %v130
    %v132 = vlaneseq
    %v133 = vshrl.u32 %v132, 7
    %v134 = vsub.s32 2, %v133
    %v135 = vrot.slane %v79, %v134
    %v136 = vmul.f32 %v122, %v131
    %v137 = vmul.f32 %v126, %v135
    %v138 = vadd.f32 %v118, %v136
    %v139 = vadd.f32 %v119, %v137
    %140 = vset.pattern.permute.xlu0 3
    %141 = vperm.xlu0 %140, %v60
    %v142 = vpop.permute.xlu0 %141
    %144 = vset.pattern.permute.xlu0 3
    %145 = vperm.xlu0 %144, %v62
    %v146 = vpop.permute.xlu0 %145
    %v148 = vlaneseq
    %v149 = vshrl.u32 %v148, 7
    %v150 = vsub.s32 3, %v149
    %v151 = vrot.slane %v78, %v150
    %v152 = vlaneseq
    %v153 = vshrl.u32 %v152, 7
    %v154 = vsub.s32 3, %v153
    %v155 = vrot.slane %v79, %v154
    %v156 = vmul.f32 %v142, %v151
    %v157 = vmul.f32 %v146, %v155
    %v158 = vadd.f32 %v138, %v156
    %v159 = vadd.f32 %v139, %v157
    %160 = vset.pattern.permute.xlu0 4
    %161 = vperm.xlu0 %160, %v60
    %v162 = vpop.permute.xlu0 %161
    %164 = vset.pattern.permute.xlu0 4
    %165 = vperm.xlu0 %164, %v62
    %v166 = vpop.permute.xlu0 %165
    %v168 = vlaneseq
    %v169 = vshrl.u32 %v168, 7
    %v170 = vsub.s32 4, %v169
    %v171 = vrot.slane %v78, %v170
    %v172 = vlaneseq
    %v173 = vshrl.u32 %v172, 7
    %v174 = vsub.s32 4, %v173
    %v175 = vrot.slane %v79, %v174
    %v176 = vmul.f32 %v162, %v171
    %v177 = vmul.f32 %v166, %v175
    %v178 = vadd.f32 %v158, %v176
    %v179 = vadd.f32 %v159, %v177
    %180 = vset.pattern.permute.xlu0 5
    %181 = vperm.xlu0 %180, %v60
    %v182 = vpop.permute.xlu0 %181
    %184 = vset.pattern.permute.xlu0 5
    %185 = vperm.xlu0 %184, %v62
    %v186 = vpop.permute.xlu0 %185
    %v188 = vlaneseq
    %v189 = vshrl.u32 %v188, 7
    %v190 = vsub.s32 5, %v189
    %v191 = vrot.slane %v78, %v190
    %v192 = vlaneseq
    %v193 = vshrl.u32 %v192, 7
    %v194 = vsub.s32 5, %v193
    %v195 = vrot.slane %v79, %v194
    %v196 = vmul.f32 %v182, %v191
    %v197 = vmul.f32 %v186, %v195
    %v198 = vadd.f32 %v178, %v196
    %v199 = vadd.f32 %v179, %v197
    %200 = vset.pattern.permute.xlu0 6
    %201 = vperm.xlu0 %200, %v60
    %v202 = vpop.permute.xlu0 %201
    %204 = vset.pattern.permute.xlu0 6
    %205 = vperm.xlu0 %204, %v62
    %v206 = vpop.permute.xlu0 %205
    %v208 = vlaneseq
    %v209 = vshrl.u32 %v208, 7
    %v210 = vsub.s32 6, %v209
    %v211 = vrot.slane %v78, %v210
    %v212 = vlaneseq
    %v213 = vshrl.u32 %v212, 7
    %v214 = vsub.s32 6, %v213
    %v215 = vrot.slane %v79, %v214
    %v216 = vmul.f32 %v202, %v211
    %v217 = vmul.f32 %v206, %v215
    %v218 = vadd.f32 %v198, %v216
    %v219 = vadd.f32 %v199, %v217
    %220 = vset.pattern.permute.xlu0 7
    %221 = vperm.xlu0 %220, %v60
    %v222 = vpop.permute.xlu0 %221
    %224 = vset.pattern.permute.xlu0 7
    %225 = vperm.xlu0 %224, %v62
    %v226 = vpop.permute.xlu0 %225
    %v228 = vlaneseq
    %v229 = vshrl.u32 %v228, 7
    %v230 = vsub.s32 7, %v229
    %v231 = vrot.slane %v78, %v230
    %v232 = vlaneseq
    %v233 = vshrl.u32 %v232, 7
    %v234 = vsub.s32 7, %v233
    %v235 = vrot.slane %v79, %v234
    %v236 = vmul.f32 %v222, %v231
    %v237 = vmul.f32 %v226, %v235
    %v238 = vadd.f32 %v218, %v236
    %v239 = vadd.f32 %v219, %v237
    %v240 = vmul.f32 %v238, %v76
    %v241 = vmul.f32 %v239, %v77
    %v242 = vld [vmem:[#allocation2] sm:$0xff]
    %v243 = vld [vmem:[#allocation2 + $0x8] sm:$0xff]
    %v244 = vadd.f32 %v242, %v240
    %v245 = vadd.f32 %v243, %v241
    %vm246 = vcmask 130048
    %247 = vst.msk [vmem:[#allocation5] sm:$0xff] %vm246, %v244
    %248 = vst.msk [vmem:[#allocation5 + $0x8] sm:$0xff] %vm246, %v245
    // Predicated region
    $region18: #{qsal_forward.1} parent=1 // pred_check
      _
    $region19: #{qsal_forward.1} parent=1 // pred_check_branch
      %250 = sbr.rel (0) target = $region21
    $region20: #{qsal_forward.1} parent=1 // pred_region
      %s252 = ssub.s32 256, 256
      %253 = vsyncadd [#allocation4], %s252
      %s254 = sshll.u32 [#allocation5], 4
      %s255 = int_to_ptr.vmem [resolvable:$true] %s254
      %260 = dma.vmem_to_hbm [thread:$0]  %s255, 256, %s3, [#allocation4], 128, 128, 8
    $region21: #{qsal_forward.1} parent=1 // pred_fallthru
      _
    // Predicated region
    $region22: #{qsal_forward.1} parent=1 // pred_check
      _
    $region23: #{qsal_forward.1} parent=1 // pred_check_branch
      %262 = sbr.rel (0) target = $region25
    $region24: #{qsal_forward.1} parent=1 // pred_region
      %263 = dma.done [#allocation4], 256
    $region25: #{qsal_forward.1} parent=1 // pred_fallthru
      _
    %264 = vsyncpa [#allocation3], 1
    %265 = vsyncpa [#allocation4], 1

</llo_original>
